<compile_context>
chip_gen: v6e
topology: v6e:2x2x1
jax: 0.10.0
libtpu: 0.0.40
codegen_flags: <defaults>
</compile_context>

<pallas_src>
import jax
import jax.numpy as jnp
from jax.experimental import pallas as pl
from jax.experimental.pallas import tpu as pltpu

C_IN = 36
C_OUT = 40


def conv1x1_pallas(x_nchw, weight, bias, *, max_hw_tile=8192,
                   target_block_bytes=2 << 20, max_batch_block=16):
    """1x1 conv (Conv2d(36, 40, 1)) in NCHW.

    x_nchw: [N, 36, H, W]; weight: [40, 36, 1, 1]; bias: [40].
    """
    n, c, h, w = x_nchw.shape
    assert c == C_IN
    hw = h * w

    # Contiguous reshapes only (no transpose, no pad).
    x3 = x_nchw.reshape(n, C_IN, hw)          # (N, 36, H*W)
    w_mat = weight.reshape(C_OUT, C_IN)       # (40, 36)
    b_mat = bias.reshape(C_OUT, 1)            # (40, 1) -- broadcasts over lanes
    itemsize = jnp.dtype(x_nchw.dtype).itemsize

    if hw <= max_hw_tile:
        # ---- Small-spatial path: full H*W per block, BN batches per step ----
        # Pick BN so the input block is ~target_block_bytes (a few MiB), capped
        # so the in-kernel unroll stays short; force BN to divide N exactly so
        # every block is full (no ragged batch blocks).
        bytes_per_batch = C_IN * hw * itemsize
        bn_target = int(max(1, min(n,
                                   target_block_bytes // max(bytes_per_batch, 1),
                                   max_batch_block)))
        bn = 1
        for d in range(bn_target, 0, -1):
            if n % d == 0:
                bn = d
                break
        grid = (n // bn,)

        def kernel(x_ref, w_ref, b_ref, o_ref):
            # x_ref: (bn, 36, hw)  w_ref: (40, 36)  b_ref: (40, 1)  o_ref: (bn, 40, hw)
            wm = w_ref[...]
            bm = b_ref[...]
            for i in range(bn):  # static unroll (bn <= max_batch_block)
                acc = jnp.dot(wm, x_ref[i], preferred_element_type=jnp.float32)
                o_ref[i] = (acc + bm).astype(o_ref.dtype)

        out3 = pl.pallas_call(
            kernel,
            out_shape=jax.ShapeDtypeStruct((n, C_OUT, hw), x_nchw.dtype),
            grid_spec=pltpu.PrefetchScalarGridSpec(
                num_scalar_prefetch=0,
                grid=grid,
                in_specs=[
                    # (bn, 36, hw): last two dims equal the full array dims.
                    pl.BlockSpec((bn, C_IN, hw), lambda i: (i, 0, 0)),
                    # Weight / bias: constant block index -> VMEM-resident.
                    pl.BlockSpec((C_OUT, C_IN), lambda i: (0, 0)),
                    pl.BlockSpec((C_OUT, 1), lambda i: (0, 0)),
                ],
                out_specs=pl.BlockSpec((bn, C_OUT, hw), lambda i: (i, 0, 0)),
            ),
            compiler_params=pltpu.CompilerParams(
                dimension_semantics=("parallel",),
            ),
        )(x3, w_mat, b_mat)
    else:
        # ---- Large-spatial path: one batch per step, balanced 128-aligned tiles ----
        n_hw_tiles = pl.cdiv(hw, max_hw_tile)
        thw = ((hw + n_hw_tiles - 1) // n_hw_tiles + 127) // 128 * 128
        grid = (n, pl.cdiv(hw, thw))

        def kernel(x_ref, w_ref, b_ref, o_ref):
            # x_ref: (36, thw)  w_ref: (40, 36)  b_ref: (40, 1)  o_ref: (40, thw)
            acc = jnp.dot(w_ref[...], x_ref[...], preferred_element_type=jnp.float32)
            o_ref[...] = (acc + b_ref[...]).astype(o_ref.dtype)

        out3 = pl.pallas_call(
            kernel,
            out_shape=jax.ShapeDtypeStruct((n, C_OUT, hw), x_nchw.dtype),
            grid_spec=pltpu.PrefetchScalarGridSpec(
                num_scalar_prefetch=0,
                grid=grid,
                in_specs=[
                    # N axis squeezed (None) -> kernel sees (36, thw).
                    pl.BlockSpec((None, C_IN, thw), lambda i, j: (i, 0, j)),
                    pl.BlockSpec((C_OUT, C_IN), lambda i, j: (0, 0)),
                    pl.BlockSpec((C_OUT, 1), lambda i, j: (0, 0)),
                ],
                out_specs=pl.BlockSpec((None, C_OUT, thw), lambda i, j: (i, 0, j)),
            ),
            compiler_params=pltpu.CompilerParams(
                dimension_semantics=("parallel", "parallel"),
            ),
        )(x3, w_mat, b_mat)

    return out3.reshape(n, C_OUT, h, w)


def reference(x_nchw, weight, bias):
    # Pure-JAX reference for the 1x1 conv.
    w_mat = weight.reshape(C_OUT, C_IN)
    out = jnp.einsum("nchw,oc->nohw", x_nchw, w_mat) + bias[None, :, None, None]
    return out.astype(x_nchw.dtype)


if __name__ == "__main__":
    key = jax.random.PRNGKey(0)
    kx, kw, kb, kx2 = jax.random.split(key, 4)

    # Deterministic PyTorch-style init: U(-bound, bound), bound = 1/sqrt(fan_in)
    fan_in = C_IN * 1 * 1
    bound = 1.0 / (fan_in ** 0.5)
    weight = jax.random.uniform(kw, (C_OUT, C_IN, 1, 1), jnp.float32, -bound, bound)
    bias = jax.random.uniform(kb, (C_OUT,), jnp.float32, -bound, bound)

    # Test 1: small-spatial path (batch-blocked, full H*W per block).
    x = jax.random.normal(kx, (2, C_IN, 16, 16), dtype=jnp.float32)
    out = jax.block_until_ready(conv1x1_pallas(x, weight, bias))
    ref = reference(x, weight, bias)
    assert out.shape == (2, C_OUT, 16, 16)
    assert jnp.allclose(out, ref, atol=2e-5, rtol=2e-5)

    # Test 2: exercise the large-spatial (balanced-tile, ragged-last-tile) path
    # by forcing a tiny max_hw_tile on a small input.
    x2 = jax.random.normal(kx2, (1, C_IN, 24, 24), dtype=jnp.float32)
    out2 = jax.block_until_ready(conv1x1_pallas(x2, weight, bias, max_hw_tile=256))
    ref2 = reference(x2, weight, bias)
    assert out2.shape == (1, C_OUT, 24, 24)
    assert jnp.allclose(out2, ref2, atol=2e-5, rtol=2e-5)

    print("KERNEL_OK")
</pallas_src>

<mosaic_0001>
module attributes {stable_mosaic.version = 11 : i64} {
  func.func @kernel(%arg0: i32, %arg1: memref<2x36x256xf32, #tpu.memory_space<vmem>>, %arg2: memref<40x36xf32, #tpu.memory_space<vmem>>, %arg3: memref<40x1xf32, #tpu.memory_space<vmem>>, %arg4: memref<2x40x256xf32, #tpu.memory_space<vmem>>) attributes {dimension_semantics = [#tpu.dimension_semantics<parallel>], iteration_bounds = array<i64: 1>, scalar_prefetch = 0 : i64, scratch_operands = 0 : i64, tpu.core_type = #tpu.core_type<tc>, window_params = [{transform_indices = @transform_0, window_bounds = array<i64: 2, 36, 256>}, {pipeline_mode = #tpu.pipeline_mode<synchronous>, transform_indices = @transform_1, window_bounds = array<i64: 40, 36>}, {pipeline_mode = #tpu.pipeline_mode<synchronous>, transform_indices = @transform_2, window_bounds = array<i64: 40, 1>}, {transform_indices = @transform_3, window_bounds = array<i64: 2, 40, 256>}]} {
    %c0 = arith.constant 0 : index
    %c0_0 = arith.constant 0 : index
    %0 = vector.load %arg2[%c0, %c0_0] : memref<40x36xf32, #tpu.memory_space<vmem>>, vector<40x36xf32>
    %c0_1 = arith.constant 0 : index
    %c0_2 = arith.constant 0 : index
    %1 = vector.load %arg3[%c0_1, %c0_2] : memref<40x1xf32, #tpu.memory_space<vmem>>, vector<40x1xf32>
    %c0_3 = arith.constant 0 : index
    %c0_4 = arith.constant 0 : index
    %c0_5 = arith.constant 0 : index
    %2 = vector.load %arg1[%c0_3, %c0_4, %c0_5] : memref<2x36x256xf32, #tpu.memory_space<vmem>>, vector<1x36x256xf32>
    %3 = vector.shape_cast %2 : vector<1x36x256xf32> to vector<36x256xf32>
    %cst = arith.constant dense<0.000000e+00> : vector<40x256xf32>
    %4 = tpu.matmul %0, %3, %cst {dimension_numbers = #tpu.dot_dimension_numbers<[1], [0], [0], [1], [0, 0, 1, 1], [], []>} : vector<40x36xf32>, vector<36x256xf32>, vector<40x256xf32> -> vector<40x256xf32>
    %5 = vector.broadcast %1 : vector<40x1xf32> to vector<40x256xf32>
    %6 = arith.addf %4, %5 : vector<40x256xf32>
    %c0_6 = arith.constant 0 : index
    %c0_7 = arith.constant 0 : index
    %c0_8 = arith.constant 0 : index
    %7 = vector.load %arg4[%c0_6, %c0_7, %c0_8] : memref<2x40x256xf32, #tpu.memory_space<vmem>>, vector<1x40x256xf32>
    %8 = vector.shape_cast %7 : vector<1x40x256xf32> to vector<40x256xf32>
    %9 = vector.shape_cast %6 : vector<40x256xf32> to vector<1x40x256xf32>
    tpu.vector_store %arg4[%c0_6, %c0_7, %c0_8], %9 {strides = array<i32>} : memref<2x40x256xf32, #tpu.memory_space<vmem>>, vector<1x40x256xf32>,
    %c1 = arith.constant 1 : index
    %c0_9 = arith.constant 0 : index
    %c0_10 = arith.constant 0 : index
    %10 = vector.load %arg1[%c1, %c0_9, %c0_10] : memref<2x36x256xf32, #tpu.memory_space<vmem>>, vector<1x36x256xf32>
    %11 = vector.shape_cast %10 : vector<1x36x256xf32> to vector<36x256xf32>
    %cst_11 = arith.constant dense<0.000000e+00> : vector<40x256xf32>
    %12 = tpu.matmul %0, %11, %cst_11 {dimension_numbers = #tpu.dot_dimension_numbers<[1], [0], [0], [1], [0, 0, 1, 1], [], []>} : vector<40x36xf32>, vector<36x256xf32>, vector<40x256xf32> -> vector<40x256xf32>
    %13 = vector.broadcast %1 : vector<40x1xf32> to vector<40x256xf32>
    %14 = arith.addf %12, %13 : vector<40x256xf32>
    %c1_12 = arith.constant 1 : index
    %c0_13 = arith.constant 0 : index
    %c0_14 = arith.constant 0 : index
    %15 = vector.load %arg4[%c1_12, %c0_13, %c0_14] : memref<2x40x256xf32, #tpu.memory_space<vmem>>, vector<1x40x256xf32>
    %16 = vector.shape_cast %15 : vector<1x40x256xf32> to vector<40x256xf32>
    %17 = vector.shape_cast %14 : vector<40x256xf32> to vector<1x40x256xf32>
    tpu.vector_store %arg4[%c1_12, %c0_13, %c0_14], %17 {strides = array<i32>} : memref<2x40x256xf32, #tpu.memory_space<vmem>>, vector<1x40x256xf32>,
    return
  }
  func.func @transform_0(%arg0: i32) -> (i32, i32, i32) {
    %c0_i32 = arith.constant 0 : i32
    %c0_i32_0 = arith.constant 0 : i32
    %c0_i32_1 = arith.constant 0 : i32
    return %arg0, %c0_i32, %c0_i32_0 : i32, i32, i32
  }
  func.func @transform_1(%arg0: i32) -> (i32, i32) {
    %c0_i32 = arith.constant 0 : i32
    %c0_i32_0 = arith.constant 0 : i32
    %c0_i32_1 = arith.constant 0 : i32
    return %c0_i32, %c0_i32_0 : i32, i32
  }
  func.func @transform_2(%arg0: i32) -> (i32, i32) {
    %c0_i32 = arith.constant 0 : i32
    %c0_i32_0 = arith.constant 0 : i32
    %c0_i32_1 = arith.constant 0 : i32
    return %c0_i32, %c0_i32_0 : i32, i32
  }
  func.func @transform_3(%arg0: i32) -> (i32, i32, i32) {
    %c0_i32 = arith.constant 0 : i32
    %c0_i32_0 = arith.constant 0 : i32
    %c0_i32_1 = arith.constant 0 : i32
    return %arg0, %c0_i32, %c0_i32_0 : i32, i32, i32
  }
}

</mosaic_0001>

<llo_original>
// kernel: tpu_custom_call.1
$region0: #{tpu_custom_call.1}
  #allocation0 [shape = 'u32[]', space=smem, size = 0x4, offset = 0x4, fixed_abs, tag = 'smem constant byte address 0x4 - core index']
  #allocation1 [shape = 'u32[144,128]{1,0:T(1,128)}', space=vmem, size = 0x12000, scoped, tag = 'internal scratch']
  %s0 = inlined_call_operand.vmem [shape: f32[2,36,256], index: 0, kind: input, shape index: {}]
  %s1 = inlined_call_operand.vmem [shape: f32[40,36], index: 1, kind: input, shape index: {}]
  %s2 = inlined_call_operand.vmem [shape: f32[40,1], index: 2, kind: input, shape index: {}]
  %s3 = inlined_call_operand.hbm [shape: f32[2,40,256], index: 3, kind: output, shape index: {}]
  %s4 = sld [smem:[#allocation0]]
  $region22: #{tpu_custom_call.1} parent=0
    _
  %s6 = ssub.s32 1, %s4
  %s7 = scalar_select 0, %s6, %s4
  $region1: #{tpu_custom_call.1} parent=0
    #allocation2 [shape = 'u8[81920]{0}', space=vmem, size = 0x14000, scoped, tag = 'output window, operand 0, single buffered']
    #allocation3 [shape = 's32[1]{0}', space=sflag, size = 0x4, scoped, tag = 'scoped memory for tpu_custom_call.1']
    %8 = vsyncpa [#allocation3], 0
    // Predicated region
    $region2: #{tpu_custom_call.1} parent=1 // pred_check
      _
    $region3: #{tpu_custom_call.1} parent=1 // pred_check_branch
      %10 = sbr.rel (0) target = $region5
    $region4: #{tpu_custom_call.1} parent=1 // pred_region
      _
    $region5: #{tpu_custom_call.1} parent=1 // pred_fallthru
      _
    // Predicated region
    $region6: #{tpu_custom_call.1} parent=1 // pred_check
      _
    $region7: #{tpu_custom_call.1} parent=1 // pred_check_branch
      %12 = sbr.rel (0) target = $region9
    $region8: #{tpu_custom_call.1} parent=1 // pred_region
      _
    $region9: #{tpu_custom_call.1} parent=1 // pred_fallthru
      _
    // Predicated region
    $region10: #{tpu_custom_call.1} parent=1 // pred_check
      _
    $region11: #{tpu_custom_call.1} parent=1 // pred_check_branch
      %14 = sbr.rel (0) target = $region13
    $region12: #{tpu_custom_call.1} parent=1 // pred_region
      _
    $region13: #{tpu_custom_call.1} parent=1 // pred_fallthru
      _
    %v15 = vld [vmem:[%s1] sm:$0xff]
    %v16 = vld [vmem:[%s1 + $0x8] sm:$0xff]
    %v17 = vld [vmem:[%s1 + $0x10] sm:$0xff]
    %v18 = vld [vmem:[%s1 + $0x18] sm:$0xff]
    %v19 = vld [vmem:[%s1 + $0x20] sm:$0xff]
    %v20 = vld [vmem:[%s2] sm:$0xff]
    %v21 = vld [vmem:[%s2 + $0x8] sm:$0xff]
    %v22 = vld [vmem:[%s2 + $0x10] sm:$0xff]
    %v23 = vld [vmem:[%s2 + $0x18] sm:$0xff]
    %v24 = vld [vmem:[%s2 + $0x20] sm:$0xff]
    %v25 = vld [vmem:[%s0] sm:$0xff]
    %v26 = vld [vmem:[%s0 + $0x8] sm:$0xff]
    %v27 = vld [vmem:[%s0 + $0x10] sm:$0xff]
    %v28 = vld [vmem:[%s0 + $0x18] sm:$0xff]
    %v29 = vld [vmem:[%s0 + $0x20] sm:$0xff]
    %v30 = vld [vmem:[%s0 + $0x28] sm:$0xff]
    %v31 = vld [vmem:[%s0 + $0x30] sm:$0xff]
    %v32 = vld [vmem:[%s0 + $0x38] sm:$0xff]
    %v33 = vld [vmem:[%s0 + $0x40] sm:$0xf]
    %v34 = vld [vmem:[%s0 + $0x48] sm:$0xf]
    %36 = vset.pattern.permute.xlu0 0
    %37 = vperm.xlu0 %36, %v20
    %v38 = vpop.permute.xlu0 %37
    %41 = vset.pattern.permute.xlu0 0
    %42 = vperm.xlu0 %41, %v21
    %v43 = vpop.permute.xlu0 %42
    %46 = vset.pattern.permute.xlu0 0
    %47 = vperm.xlu0 %46, %v22
    %v48 = vpop.permute.xlu0 %47
    %51 = vset.pattern.permute.xlu0 0
    %52 = vperm.xlu0 %51, %v23
    %v53 = vpop.permute.xlu0 %52
    %56 = vset.pattern.permute.xlu0 0
    %57 = vperm.xlu0 %56, %v24
    %v58 = vpop.permute.xlu0 %57
    %vm60 = vcmask 293888
    %v62 = vsel %vm60, %v15, 0
    %v65 = vsel %vm60, %v16, 0
    %v68 = vsel %vm60, %v17, 0
    %v71 = vsel %vm60, %v18, 0
    %v74 = vsel %vm60, %v19, 0
    %vm76 = vcmask 1043456
    %v78 = vsel %vm76, %v33, 0
    %v81 = vsel %vm76, %v34, 0
    %83 = vmatprep.subr.mxu0 0.0
    %84 = vmatpush1.msra.mxu0 0.0
    %85 = vmatprep.subr.mxu0 0.0
    %86 = vmatpush1.msra.mxu0 0.0
    %87 = vmatprep.subr.mxu0 0.0
    %88 = vmatpush1.msra.mxu0 0.0
    %89 = vmatprep.subr.mxu0 0.0
    %90 = vmatpush1.msra.mxu0 0.0
    %91 = vmatprep.subr.mxu0 0.0
    %92 = vmatpush1.msra.mxu0 0.0
    %93 = vmatprep.subr.mxu0 0.0
    %94 = vmatpush1.msra.mxu0 0.0
    %95 = vmatprep.subr.mxu0 0.0
    %96 = vmatpush1.msra.mxu0 0.0
    %97 = vmatprep.subr.mxu0 0.0
    %98 = vmatpush1.msra.mxu0 0.0
    %99 = vmatprep.subr.mxu0 0.0
    %100 = vmatpush1.msra.mxu0 0.0
    %101 = vmatprep.subr.mxu0 0.0
    %102 = vmatpush1.msra.mxu0 0.0
    %103 = vmatprep.subr.mxu0 0.0
    %104 = vmatpush1.msra.mxu0 0.0
    %105 = vmatprep.subr.mxu0 %v81
    %106 = vmatpush1.msra.mxu0 %v78
    %107 = vmatprep.subr.mxu0 %v32
    %108 = vmatpush1.msra.mxu0 %v31
    %109 = vmatprep.subr.mxu0 %v30
    %110 = vmatpush1.msra.mxu0 %v29
    %111 = vmatprep.subr.mxu0 %v28
    %112 = vmatpush1.msra.mxu0 %v27
    %113 = vmatprep.subr.mxu0 %v26
    %114 = vmatpush1.msra.mxu0 %v25
    %115 = vmatprep.subr.mxu0 0.0
    %116 = vmatpush2.msra.mxu0 0.0
    %117 = vmatprep.subr.mxu0 0.0
    %118 = vmatpush2.msra.mxu0 0.0
    %119 = vmatprep.subr.mxu0 0.0
    %120 = vmatpush2.msra.mxu0 0.0
    %121 = vmatprep.subr.mxu0 0.0
    %122 = vmatpush2.msra.mxu0 0.0
    %123 = vmatprep.subr.mxu0 0.0
    %124 = vmatpush2.msra.mxu0 0.0
    %125 = vmatprep.subr.mxu0 0.0
    %126 = vmatpush2.msra.mxu0 0.0
    %127 = vmatprep.subr.mxu0 0.0
    %128 = vmatpush2.msra.mxu0 0.0
    %129 = vmatprep.subr.mxu0 0.0
    %130 = vmatpush2.msra.mxu0 0.0
    %131 = vmatprep.subr.mxu0 0.0
    %132 = vmatpush2.msra.mxu0 0.0
    %133 = vmatprep.subr.mxu0 0.0
    %134 = vmatpush2.msra.mxu0 0.0
    %135 = vmatprep.subr.mxu0 0.0
    %136 = vmatpush2.msra.mxu0 0.0
    %137 = vmatprep.subr.mxu0 0.0
    %138 = vmatpush2.msra.mxu0 0.0
    %139 = vmatprep.subr.mxu0 0.0
    %140 = vmatpush2.msra.mxu0 0.0
    %141 = vmatprep.subr.mxu0 0.0
    %142 = vmatpush2.msra.mxu0 0.0
    %143 = vmatprep.subr.mxu0 0.0
    %144 = vmatpush2.msra.mxu0 0.0
    %145 = vmatprep.subr.mxu0 0.0
    %146 = vmatpush2.msra.mxu0 0.0
    %147 = vmatprep.mubr.f32.mxu0 0.0
    %148 = vmatmul.mubr.f32.gmra.mxu0 %v62
    %v149 = vpop.f32.mrf.mxu0
    %v150 = vadd.f32 %v38, %v149
    %v151 = vpop.f32.mrf.mxu0
    %v152 = vadd.f32 %v38, %v151
    %153 = vmatprep.mubr.f32.mxu0 0.0
    %154 = vmatmul.mubr.f32.gmra.mxu0 %v65
    %v155 = vpop.f32.mrf.mxu0
    %v156 = vadd.f32 %v43, %v155
    %v157 = vpop.f32.mrf.mxu0
    %v158 = vadd.f32 %v43, %v157
    %159 = vmatprep.mubr.f32.mxu0 0.0
    %160 = vmatmul.mubr.f32.gmra.mxu0 %v68
    %v161 = vpop.f32.mrf.mxu0
    %v162 = vadd.f32 %v48, %v161
    %v163 = vpop.f32.mrf.mxu0
    %v164 = vadd.f32 %v48, %v163
    %165 = vmatprep.mubr.f32.mxu0 0.0
    %166 = vmatmul.mubr.f32.gmra.mxu0 %v71
    %v167 = vpop.f32.mrf.mxu0
    %v168 = vadd.f32 %v53, %v167
    %v169 = vpop.f32.mrf.mxu0
    %v170 = vadd.f32 %v53, %v169
    %171 = vmatprep.mubr.f32.mxu0 0.0
    %172 = vmatmul.mubr.f32.gmra.mxu0 %v74
    %v173 = vpop.f32.mrf.mxu0
    %v174 = vadd.f32 %v58, %v173
    %v175 = vpop.f32.mrf.mxu0
    %v176 = vadd.f32 %v58, %v175
    %177 = vdwg.mxu0
    %178 = vst [vmem:[#allocation2] sm:$0xff] %v150
    %179 = vst [vmem:[#allocation2 + $0x8] sm:$0xff] %v152
    %180 = vst [vmem:[#allocation2 + $0x10] sm:$0xff] %v156
    %181 = vst [vmem:[#allocation2 + $0x18] sm:$0xff] %v158
    %182 = vst [vmem:[#allocation2 + $0x20] sm:$0xff] %v162
    %183 = vst [vmem:[#allocation2 + $0x28] sm:$0xff] %v164
    %184 = vst [vmem:[#allocation2 + $0x30] sm:$0xff] %v168
    %185 = vst [vmem:[#allocation2 + $0x38] sm:$0xff] %v170
    %186 = vst [vmem:[#allocation2 + $0x40] sm:$0xff] %v174
    %187 = vst [vmem:[#allocation2 + $0x48] sm:$0xff] %v176
    %s188 = scalar_lea.vmem %s0, 80
    %v189 = vld [vmem:[%s188] sm:$0xff]
    %v190 = vld [vmem:[%s188 + $0x8] sm:$0xff]
    %v191 = vld [vmem:[%s188 + $0x10] sm:$0xff]
    %v192 = vld [vmem:[%s188 + $0x18] sm:$0xff]
    %v193 = vld [vmem:[%s188 + $0x20] sm:$0xff]
    %v194 = vld [vmem:[%s188 + $0x28] sm:$0xff]
    %v195 = vld [vmem:[%s188 + $0x30] sm:$0xff]
    %v196 = vld [vmem:[%s188 + $0x38] sm:$0xff]
    %v197 = vld [vmem:[%s188 + $0x40] sm:$0xf]
    %v198 = vld [vmem:[%s188 + $0x48] sm:$0xf]
    %v200 = vsel %vm76, %v197, 0
    %v203 = vsel %vm76, %v198, 0
    %205 = vmatprep.subr.mxu0 0.0
    %206 = vmatpush1.msra.mxu0 0.0
    %207 = vmatprep.subr.mxu0 0.0
    %208 = vmatpush1.msra.mxu0 0.0
    %209 = vmatprep.subr.mxu0 0.0
    %210 = vmatpush1.msra.mxu0 0.0
    %211 = vmatprep.subr.mxu0 0.0
    %212 = vmatpush1.msra.mxu0 0.0
    %213 = vmatprep.subr.mxu0 0.0
    %214 = vmatpush1.msra.mxu0 0.0
    %215 = vmatprep.subr.mxu0 0.0
    %216 = vmatpush1.msra.mxu0 0.0
    %217 = vmatprep.subr.mxu0 0.0
    %218 = vmatpush1.msra.mxu0 0.0
    %219 = vmatprep.subr.mxu0 0.0
    %220 = vmatpush1.msra.mxu0 0.0
    %221 = vmatprep.subr.mxu0 0.0
    %222 = vmatpush1.msra.mxu0 0.0
    %223 = vmatprep.subr.mxu0 0.0
    %224 = vmatpush1.msra.mxu0 0.0
    %225 = vmatprep.subr.mxu0 0.0
    %226 = vmatpush1.msra.mxu0 0.0
    %227 = vmatprep.subr.mxu0 %v203
    %228 = vmatpush1.msra.mxu0 %v200
    %229 = vmatprep.subr.mxu0 %v196
    %230 = vmatpush1.msra.mxu0 %v195
    %231 = vmatprep.subr.mxu0 %v194
    %232 = vmatpush1.msra.mxu0 %v193
    %233 = vmatprep.subr.mxu0 %v192
    %234 = vmatpush1.msra.mxu0 %v191
    %235 = vmatprep.subr.mxu0 %v190
    %236 = vmatpush1.msra.mxu0 %v189
    %237 = vmatprep.subr.mxu0 0.0
    %238 = vmatpush2.msra.mxu0 0.0
    %239 = vmatprep.subr.mxu0 0.0
    %240 = vmatpush2.msra.mxu0 0.0
    %241 = vmatprep.subr.mxu0 0.0
    %242 = vmatpush2.msra.mxu0 0.0
    %243 = vmatprep.subr.mxu0 0.0
    %244 = vmatpush2.msra.mxu0 0.0
    %245 = vmatprep.subr.mxu0 0.0
    %246 = vmatpush2.msra.mxu0 0.0
    %247 = vmatprep.subr.mxu0 0.0
    %248 = vmatpush2.msra.mxu0 0.0
    %249 = vmatprep.subr.mxu0 0.0
    %250 = vmatpush2.msra.mxu0 0.0
    %251 = vmatprep.subr.mxu0 0.0
    %252 = vmatpush2.msra.mxu0 0.0
    %253 = vmatprep.subr.mxu0 0.0
    %254 = vmatpush2.msra.mxu0 0.0
    %255 = vmatprep.subr.mxu0 0.0
    %256 = vmatpush2.msra.mxu0 0.0
    %257 = vmatprep.subr.mxu0 0.0
    %258 = vmatpush2.msra.mxu0 0.0
    %259 = vmatprep.subr.mxu0 0.0
    %260 = vmatpush2.msra.mxu0 0.0
    %261 = vmatprep.subr.mxu0 0.0
    %262 = vmatpush2.msra.mxu0 0.0
    %263 = vmatprep.subr.mxu0 0.0
    %264 = vmatpush2.msra.mxu0 0.0
    %265 = vmatprep.subr.mxu0 0.0
    %266 = vmatpush2.msra.mxu0 0.0
    %267 = vmatprep.subr.mxu0 0.0
    %268 = vmatpush2.msra.mxu0 0.0
    %269 = vmatprep.mubr.f32.mxu0 0.0
    %270 = vmatmul.mubr.f32.gmra.mxu0 %v62
    %v271 = vpop.f32.mrf.mxu0
    %v272 = vadd.f32 %v38, %v271
    %v273 = vpop.f32.mrf.mxu0
    %v274 = vadd.f32 %v38, %v273
    %275 = vmatprep.mubr.f32.mxu0 0.0
    %276 = vmatmul.mubr.f32.gmra.mxu0 %v65
    %v277 = vpop.f32.mrf.mxu0
    %v278 = vadd.f32 %v43, %v277
    %v279 = vpop.f32.mrf.mxu0
    %v280 = vadd.f32 %v43, %v279
    %281 = vmatprep.mubr.f32.mxu0 0.0
    %282 = vmatmul.mubr.f32.gmra.mxu0 %v68
    %v283 = vpop.f32.mrf.mxu0
    %v284 = vadd.f32 %v48, %v283
    %v285 = vpop.f32.mrf.mxu0
    %v286 = vadd.f32 %v48, %v285
    %287 = vmatprep.mubr.f32.mxu0 0.0
    %288 = vmatmul.mubr.f32.gmra.mxu0 %v71
    %v289 = vpop.f32.mrf.mxu0
    %v290 = vadd.f32 %v53, %v289
    %v291 = vpop.f32.mrf.mxu0
    %v292 = vadd.f32 %v53, %v291
    %293 = vmatprep.mubr.f32.mxu0 0.0
    %294 = vmatmul.mubr.f32.gmra.mxu0 %v74
    %v295 = vpop.f32.mrf.mxu0
    %v296 = vadd.f32 %v58, %v295
    %v297 = vpop.f32.mrf.mxu0
    %v298 = vadd.f32 %v58, %v297
    %299 = vdwg.mxu0
    %s300 = scalar_lea.vmem [#allocation2], 80
    %301 = vst [vmem:[%s300] sm:$0xff] %v272
    %302 = vst [vmem:[%s300 + $0x8] sm:$0xff] %v274
    %303 = vst [vmem:[%s300 + $0x10] sm:$0xff] %v278
    %304 = vst [vmem:[%s300 + $0x18] sm:$0xff] %v280
    %305 = vst [vmem:[%s300 + $0x20] sm:$0xff] %v284
    %306 = vst [vmem:[%s300 + $0x28] sm:$0xff] %v286
    %307 = vst [vmem:[%s300 + $0x30] sm:$0xff] %v290
    %308 = vst [vmem:[%s300 + $0x38] sm:$0xff] %v292
    %309 = vst [vmem:[%s300 + $0x40] sm:$0xff] %v296
    %310 = vst [vmem:[%s300 + $0x48] sm:$0xff] %v298
    // Predicated region
    $region14: #{tpu_custom_call.1} parent=1 // pred_check
      _
    $region15: #{tpu_custom_call.1} parent=1 // pred_check_branch
      %312 = sbr.rel (0) target = $region17
    $region16: #{tpu_custom_call.1} parent=1 // pred_region
      %s314 = ssub.s32 2560, 2560
      %315 = vsyncadd [#allocation3], %s314
      %s316 = sshll.u32 [#allocation2], 4
      %s317 = int_to_ptr.vmem [resolvable:$true] %s316
      %322 = dma.vmem_to_hbm [thread:$0]  %s317, 2560, %s3, [#allocation3], 256, 256, 16
    $region17: #{tpu_custom_call.1} parent=1 // pred_fallthru
      _
    // Predicated region
    $region18: #{tpu_custom_call.1} parent=1 // pred_check
      _
    $region19: #{tpu_custom_call.1} parent=1 // pred_check_branch
      %324 = sbr.rel (0) target = $region21
    $region20: #{tpu_custom_call.1} parent=1 // pred_region
      %325 = dma.done [#allocation3], 2560
    $region21: #{tpu_custom_call.1} parent=1 // pred_fallthru
      _
    %326 = vsyncpa [#allocation3], 1

</llo_original>
